<compile_context>
chip_gen: v7x
topology: tpu7x:2x2x1
jax: 0.10.0
libtpu: 0.0.40
codegen_flags: <defaults>
</compile_context>

<pallas_src>
import functools

import jax
import jax.numpy as jnp
from jax.experimental import pallas as pl
from jax.experimental.pallas import tpu as pltpu


# ----------------------------------------------------------------------------
# Kernel
# ----------------------------------------------------------------------------
def noisy_linear_kernel(x_ref, wmu_ref, wsig_ref, ein_ref, eout_ref,
                        bmu_ref, bsig_ref, beps_ref, o_ref,
                        acc_mu_ref, acc_sig_ref):
    k = pl.program_id(1)

    @pl.when(k == 0)
    def _():
        acc_mu_ref[...] = jnp.zeros_like(acc_mu_ref)
        acc_sig_ref[...] = jnp.zeros_like(acc_sig_ref)

    x = x_ref[...]                           # (Bp, TK)
    xs = x * ein_ref[...]                    # fold eps_in into x (VPU, B*TK work)

    # Weights are stored transposed (in_f, out_f): native (B,TK)@(TK,TN) MXU op.
    acc_mu_ref[...] += jnp.dot(x, wmu_ref[...],
                               preferred_element_type=jnp.float32)
    acc_sig_ref[...] += jnp.dot(xs, wsig_ref[...],
                                preferred_element_type=jnp.float32)

    @pl.when(k == pl.num_programs(1) - 1)
    def _():
        b = bmu_ref[...] + bsig_ref[...] * beps_ref[...]       # (1, TN)
        y = acc_mu_ref[...] + acc_sig_ref[...] * eout_ref[...] + b
        o_ref[...] = y.astype(o_ref.dtype)


# ----------------------------------------------------------------------------
# Helpers
# ----------------------------------------------------------------------------
def _round_up(v, m):
    return ((v + m - 1) // m) * m


def _pad2(a, shape):
    pads = [(0, s - d) for d, s in zip(a.shape, shape)]
    return jnp.pad(a, pads)


def _vmem_limit_bytes(Bp, TN, TK):
    """Tile-derived VMEM budget, capped by the chip's physical capacity."""
    need = 2 * 2 * TN * TK * 4            # wmu_t + wsig_t, double-buffered, f32
    need += 2 * Bp * TK * 4               # x tiles, double-buffered
    need += 2 * Bp * TN * 4               # out tiles, double-buffered
    need += 2 * Bp * TN * 4               # two f32 accumulators
    need += 2 * 4 * (TK + 4 * TN) * 4     # eps/bias row vectors (generous)
    need += 4 * 1024 * 1024               # headroom for compiler scratch
    try:
        info = pltpu.get_tpu_info()
        cap = getattr(info, "vmem_capacity_bytes", None) or (64 * 1024 * 1024)
    except Exception:
        cap = 64 * 1024 * 1024            # conservative (v7x physical)
    return int(min(max(need, 32 * 1024 * 1024), int(cap * 3 // 4)))


# ----------------------------------------------------------------------------
# One-time parameter preparation (NOT in the per-step hot path)
# ----------------------------------------------------------------------------
def prepare_noisy_linear(weight_mu, weight_sigma, eps_out, eps_in,
                         bias_mu, bias_sigma, bias_epsilon, *, tn=512, tk=1024):
    """Pad to lane-dense multiples of 128 and pre-transpose the weights once.

    Returns (prepared_arrays, meta).  Call this once after init / reset_noise,
    not inside the training step.
    """
    out_f, in_f = weight_mu.shape

    TN = min(tn, _round_up(out_f, 128))
    TK = min(tk, _round_up(in_f, 128))
    # v7x has 2 TensorCores: ensure the "parallel" N axis has >= 2 programs.
    if out_f >= 256 and _round_up(out_f, TN) // TN == 1:
        TN = _round_up(-(-out_f // 2), 128)
    Np = _round_up(out_f, TN)
    Kp = _round_up(in_f, TK)

    prepared = (
        _pad2(weight_mu.T, (Kp, Np)),                   # wmu_t
        _pad2(weight_sigma.T, (Kp, Np)),                # wsig_t
        _pad2(eps_in.reshape(1, in_f), (1, Kp)),        # eps_in row
        _pad2(eps_out.reshape(1, out_f), (1, Np)),      # eps_out row
        _pad2(bias_mu.reshape(1, out_f), (1, Np)),
        _pad2(bias_sigma.reshape(1, out_f), (1, Np)),
        _pad2(bias_epsilon.reshape(1, out_f), (1, Np)),
    )
    meta = dict(in_f=in_f, out_f=out_f, TN=TN, TK=TK, Np=Np, Kp=Kp)
    return prepared, meta


# ----------------------------------------------------------------------------
# Forward
# ----------------------------------------------------------------------------
@functools.partial(jax.jit, static_argnames=("out_f", "tn", "tk"))
def _noisy_linear_padded(x, wmu_t, wsig_t, ein, eout, bmu, bsig, beps,
                         *, out_f, tn, tk):
    B, _ = x.shape
    Kp, Np = wmu_t.shape
    TN, TK = tn, tk
    Bp = _round_up(B, 8)

    # x is the only per-call pad; it is tiny compared to the weight traffic,
    # and padded K columns multiply zero-padded weight rows (math stays exact).
    xp = _pad2(x, (Bp, Kp))

    grid = (Np // TN, Kp // TK)   # (out_f tiles = parallel, K tiles = reduction)

    out = pl.pallas_call(
        noisy_linear_kernel,
        out_shape=jax.ShapeDtypeStruct((Bp, Np), x.dtype),
        grid_spec=pltpu.PrefetchScalarGridSpec(
            num_scalar_prefetch=0,
            grid=grid,
            in_specs=[
                pl.BlockSpec((Bp, TK), lambda j, k: (0, k)),   # x
                pl.BlockSpec((TK, TN), lambda j, k: (k, j)),   # weight_mu.T
                pl.BlockSpec((TK, TN), lambda j, k: (k, j)),   # weight_sigma.T
                pl.BlockSpec((1, TK),  lambda j, k: (0, k)),   # eps_in row
                pl.BlockSpec((1, TN),  lambda j, k: (0, j)),   # eps_out row
                pl.BlockSpec((1, TN),  lambda j, k: (0, j)),   # bias_mu
                pl.BlockSpec((1, TN),  lambda j, k: (0, j)),   # bias_sigma
                pl.BlockSpec((1, TN),  lambda j, k: (0, j)),   # bias_epsilon
            ],
            out_specs=pl.BlockSpec((Bp, TN), lambda j, k: (0, j)),
            scratch_shapes=[pltpu.VMEM((Bp, TN), jnp.float32),
                            pltpu.VMEM((Bp, TN), jnp.float32)],
        ),
        compiler_params=pltpu.CompilerParams(
            dimension_semantics=("parallel", "arbitrary"),
            vmem_limit_bytes=_vmem_limit_bytes(Bp, TN, TK),
        ),
    )(xp, wmu_t, wsig_t, ein, eout, bmu, bsig, beps)

    return out[:B, :out_f]


def noisy_linear(x, prepared, meta):
    """Training-mode NoisyLinear forward: x (B, in_f) -> (B, out_f)."""
    return _noisy_linear_padded(x, *prepared, out_f=meta["out_f"],
                                tn=meta["TN"], tk=meta["TK"])


# ----------------------------------------------------------------------------
# Parameter init (matches NoisyLinear.reset_parameters / reset_noise)
# ----------------------------------------------------------------------------
def init_noisy_linear_params(key, in_f, out_f, sigma_init):
    k_wmu, k_bmu, k_ein, k_eout = jax.random.split(key, 4)
    bound = 1.0 / (in_f ** 0.5)

    weight_mu = jax.random.uniform(k_wmu, (out_f, in_f), jnp.float32,
                                   minval=-bound, maxval=bound)
    weight_sigma = jnp.full((out_f, in_f), sigma_init / (in_f ** 0.5), jnp.float32)
    bias_mu = jax.random.uniform(k_bmu, (out_f,), jnp.float32,
                                 minval=-bound, maxval=bound)
    bias_sigma = jnp.full((out_f,), sigma_init / (out_f ** 0.5), jnp.float32)

    # Factorised Gaussian noise: f(v) = sign(v) * sqrt(|v|)
    f = lambda v: jnp.sign(v) * jnp.sqrt(jnp.abs(v))
    eps_in = f(jax.random.normal(k_ein, (in_f,), jnp.float32))
    eps_out = f(jax.random.normal(k_eout, (out_f,), jnp.float32))
    bias_epsilon = eps_out                              # matches the module

    return (weight_mu, weight_sigma, eps_out, eps_in,
            bias_mu, bias_sigma, bias_epsilon)


def _reference(x, params):
    (wmu, wsig, eps_out, eps_in, bmu, bsig, beps) = params
    w = wmu + wsig * jnp.outer(eps_out, eps_in)
    b = bmu + bsig * beps
    return x @ w.T + b


# ----------------------------------------------------------------------------
# Self-test
# ----------------------------------------------------------------------------
if __name__ == "__main__":
    sigma_init = 0.5
    key = jax.random.PRNGKey(0)

    def _run_case(key, B, in_f, out_f):
        k_x, k_p = jax.random.split(key)
        x = jax.random.normal(k_x, (B, in_f), jnp.float32)
        params = init_noisy_linear_params(k_p, in_f, out_f, sigma_init)
        prepared, meta = prepare_noisy_linear(*params)
        out = jax.block_until_ready(noisy_linear(x, prepared, meta))
        ref = _reference(x, params)
        assert out.shape == (B, out_f)
        assert jnp.allclose(out, ref, atol=1e-4, rtol=1e-5), \
            f"mismatch for B={B}, in_f={in_f}, out_f={out_f}"

    k1, k2, k3, key = jax.random.split(key, 4)

    # Case 1: small shapes from the original demo (single tile, padding path).
    _run_case(k1, B=8, in_f=32, out_f=64)

    # Case 2: two N tiles (>=2 programs on the parallel axis), single K tile.
    _run_case(k2, B=16, in_f=384, out_f=512)

    # Case 3: ragged shapes -> 2 N tiles and 2 K tiles (exercises accumulator).
    _run_case(k3, B=4, in_f=1100, out_f=300)

    print("KERNEL_OK")
</pallas_src>

<mosaic_0001>
module attributes {stable_mosaic.version = 11 : i64} {
  func.func @noisy_linear_kernel(%arg0: i32, %arg1: i32, %arg2: memref<8x128xf32, #tpu.memory_space<vmem>>, %arg3: memref<128x128xf32, #tpu.memory_space<vmem>>, %arg4: memref<128x128xf32, #tpu.memory_space<vmem>>, %arg5: memref<1x128xf32, #tpu.memory_space<vmem>>, %arg6: memref<1x128xf32, #tpu.memory_space<vmem>>, %arg7: memref<1x128xf32, #tpu.memory_space<vmem>>, %arg8: memref<1x128xf32, #tpu.memory_space<vmem>>, %arg9: memref<1x128xf32, #tpu.memory_space<vmem>>, %arg10: memref<8x128xf32, #tpu.memory_space<vmem>>, %arg11: memref<8x128xf32, #tpu.memory_space<vmem>>, %arg12: memref<8x128xf32, #tpu.memory_space<vmem>>) attributes {dimension_semantics = [#tpu.dimension_semantics<parallel>, #tpu.dimension_semantics<arbitrary>], iteration_bounds = array<i64: 1, 1>, scalar_prefetch = 0 : i64, scratch_operands = 2 : i64, tpu.core_type = #tpu.core_type<tc>, window_params = [{transform_indices = @transform_0, window_bounds = array<i64: 8, 128>}, {transform_indices = @transform_1, window_bounds = array<i64: 128, 128>}, {transform_indices = @transform_2, window_bounds = array<i64: 128, 128>}, {transform_indices = @transform_3, window_bounds = array<i64: 1, 128>}, {transform_indices = @transform_4, window_bounds = array<i64: 1, 128>}, {transform_indices = @transform_5, window_bounds = array<i64: 1, 128>}, {transform_indices = @transform_6, window_bounds = array<i64: 1, 128>}, {transform_indices = @transform_7, window_bounds = array<i64: 1, 128>}, {transform_indices = @transform_8, window_bounds = array<i64: 8, 128>}]} {
    %c0_i32 = arith.constant 0 : i32
    %0 = arith.cmpi eq, %arg1, %c0_i32 : i32
    %1 = arith.extui %0 : i1 to i32
    %c0_i32_0 = arith.constant 0 : i32
    %2 = arith.cmpi ne, %1, %c0_i32_0 : i32
    scf.if %2 {
      %cst_19 = arith.constant 0.000000e+00 : f32
      %20 = vector.broadcast %cst_19 : f32 to vector<8x128xf32>
      %c0_20 = arith.constant 0 : index
      %c0_21 = arith.constant 0 : index
      %21 = vector.load %arg11[%c0_20, %c0_21] : memref<8x128xf32, #tpu.memory_space<vmem>>, vector<8x128xf32>
      tpu.vector_store %arg11[%c0_20, %c0_21], %20 {strides = array<i32>} : memref<8x128xf32, #tpu.memory_space<vmem>>, vector<8x128xf32>,
      %cst_22 = arith.constant 0.000000e+00 : f32
      %22 = vector.broadcast %cst_22 : f32 to vector<8x128xf32>
      %c0_23 = arith.constant 0 : index
      %c0_24 = arith.constant 0 : index
      %23 = vector.load %arg12[%c0_23, %c0_24] : memref<8x128xf32, #tpu.memory_space<vmem>>, vector<8x128xf32>
      tpu.vector_store %arg12[%c0_23, %c0_24], %22 {strides = array<i32>} : memref<8x128xf32, #tpu.memory_space<vmem>>, vector<8x128xf32>,
    } else {
    }
    %c0 = arith.constant 0 : index
    %c0_1 = arith.constant 0 : index
    %3 = vector.load %arg2[%c0, %c0_1] : memref<8x128xf32, #tpu.memory_space<vmem>>, vector<8x128xf32>
    %c0_2 = arith.constant 0 : index
    %c0_3 = arith.constant 0 : index
    %4 = vector.load %arg5[%c0_2, %c0_3] : memref<1x128xf32, #tpu.memory_space<vmem>>, vector<1x128xf32>
    %5 = vector.broadcast %4 : vector<1x128xf32> to vector<8x128xf32>
    %6 = arith.mulf %3, %5 : vector<8x128xf32>
    %c0_4 = arith.constant 0 : index
    %c0_5 = arith.constant 0 : index
    %7 = vector.load %arg11[%c0_4, %c0_5] : memref<8x128xf32, #tpu.memory_space<vmem>>, vector<8x128xf32>
    %c0_6 = arith.constant 0 : index
    %c0_7 = arith.constant 0 : index
    %8 = vector.load %arg3[%c0_6, %c0_7] : memref<128x128xf32, #tpu.memory_space<vmem>>, vector<128x128xf32>
    %cst = arith.constant dense<0.000000e+00> : vector<8x128xf32>
    %9 = tpu.matmul %3, %8, %cst {dimension_numbers = #tpu.dot_dimension_numbers<[1], [0], [0], [1], [0, 0, 1, 1], [], []>} : vector<8x128xf32>, vector<128x128xf32>, vector<8x128xf32> -> vector<8x128xf32>
    %10 = arith.addf %7, %9 : vector<8x128xf32>
    %c0_8 = arith.constant 0 : index
    %c0_9 = arith.constant 0 : index
    %11 = vector.load %arg11[%c0_8, %c0_9] : memref<8x128xf32, #tpu.memory_space<vmem>>, vector<8x128xf32>
    tpu.vector_store %arg11[%c0_8, %c0_9], %10 {strides = array<i32>} : memref<8x128xf32, #tpu.memory_space<vmem>>, vector<8x128xf32>,
    %c0_10 = arith.constant 0 : index
    %c0_11 = arith.constant 0 : index
    %12 = vector.load %arg12[%c0_10, %c0_11] : memref<8x128xf32, #tpu.memory_space<vmem>>, vector<8x128xf32>
    %c0_12 = arith.constant 0 : index
    %c0_13 = arith.constant 0 : index
    %13 = vector.load %arg4[%c0_12, %c0_13] : memref<128x128xf32, #tpu.memory_space<vmem>>, vector<128x128xf32>
    %cst_14 = arith.constant dense<0.000000e+00> : vector<8x128xf32>
    %14 = tpu.matmul %6, %13, %cst_14 {dimension_numbers = #tpu.dot_dimension_numbers<[1], [0], [0], [1], [0, 0, 1, 1], [], []>} : vector<8x128xf32>, vector<128x128xf32>, vector<8x128xf32> -> vector<8x128xf32>
    %15 = arith.addf %12, %14 : vector<8x128xf32>
    %c0_15 = arith.constant 0 : index
    %c0_16 = arith.constant 0 : index
    %16 = vector.load %arg12[%c0_15, %c0_16] : memref<8x128xf32, #tpu.memory_space<vmem>>, vector<8x128xf32>
    tpu.vector_store %arg12[%c0_15, %c0_16], %15 {strides = array<i32>} : memref<8x128xf32, #tpu.memory_space<vmem>>, vector<8x128xf32>,
    %c0_i32_17 = arith.constant 0 : i32
    %17 = arith.cmpi eq, %arg1, %c0_i32_17 : i32
    %18 = arith.extui %17 : i1 to i32
    %c0_i32_18 = arith.constant 0 : i32
    %19 = arith.cmpi ne, %18, %c0_i32_18 : i32
    scf.if %19 {
      %c0_19 = arith.constant 0 : index
      %c0_20 = arith.constant 0 : index
      %20 = vector.load %arg7[%c0_19, %c0_20] : memref<1x128xf32, #tpu.memory_space<vmem>>, vector<1x128xf32>
      %c0_21 = arith.constant 0 : index
      %c0_22 = arith.constant 0 : index
      %21 = vector.load %arg8[%c0_21, %c0_22] : memref<1x128xf32, #tpu.memory_space<vmem>>, vector<1x128xf32>
      %c0_23 = arith.constant 0 : index
      %c0_24 = arith.constant 0 : index
      %22 = vector.load %arg9[%c0_23, %c0_24] : memref<1x128xf32, #tpu.memory_space<vmem>>, vector<1x128xf32>
      %23 = arith.mulf %21, %22 : vector<1x128xf32>
      %24 = arith.addf %20, %23 : vector<1x128xf32>
      %c0_25 = arith.constant 0 : index
      %c0_26 = arith.constant 0 : index
      %25 = vector.load %arg11[%c0_25, %c0_26] : memref<8x128xf32, #tpu.memory_space<vmem>>, vector<8x128xf32>
      %c0_27 = arith.constant 0 : index
      %c0_28 = arith.constant 0 : index
      %26 = vector.load %arg12[%c0_27, %c0_28] : memref<8x128xf32, #tpu.memory_space<vmem>>, vector<8x128xf32>
      %c0_29 = arith.constant 0 : index
      %c0_30 = arith.constant 0 : index
      %27 = vector.load %arg6[%c0_29, %c0_30] : memref<1x128xf32, #tpu.memory_space<vmem>>, vector<1x128xf32>
      %28 = vector.broadcast %27 : vector<1x128xf32> to vector<8x128xf32>
      %29 = arith.mulf %26, %28 : vector<8x128xf32>
      %30 = arith.addf %25, %29 : vector<8x128xf32>
      %31 = vector.broadcast %24 : vector<1x128xf32> to vector<8x128xf32>
      %32 = arith.addf %30, %31 : vector<8x128xf32>
      %c0_31 = arith.constant 0 : index
      %c0_32 = arith.constant 0 : index
      %33 = vector.load %arg10[%c0_31, %c0_32] : memref<8x128xf32, #tpu.memory_space<vmem>>, vector<8x128xf32>
      tpu.vector_store %arg10[%c0_31, %c0_32], %32 {strides = array<i32>} : memref<8x128xf32, #tpu.memory_space<vmem>>, vector<8x128xf32>,
    } else {
    }
    return
  }
  func.func @transform_0(%arg0: i32, %arg1: i32) -> (i32, i32) {
    %c0_i32 = arith.constant 0 : i32
    %c0_i32_0 = arith.constant 0 : i32
    return %c0_i32, %arg1 : i32, i32
  }
  func.func @transform_1(%arg0: i32, %arg1: i32) -> (i32, i32) {
    %c0_i32 = arith.constant 0 : i32
    return %arg1, %arg0 : i32, i32
  }
  func.func @transform_2(%arg0: i32, %arg1: i32) -> (i32, i32) {
    %c0_i32 = arith.constant 0 : i32
    return %arg1, %arg0 : i32, i32
  }
  func.func @transform_3(%arg0: i32, %arg1: i32) -> (i32, i32) {
    %c0_i32 = arith.constant 0 : i32
    %c0_i32_0 = arith.constant 0 : i32
    return %c0_i32, %arg1 : i32, i32
  }
  func.func @transform_4(%arg0: i32, %arg1: i32) -> (i32, i32) {
    %c0_i32 = arith.constant 0 : i32
    %c0_i32_0 = arith.constant 0 : i32
    return %c0_i32, %arg0 : i32, i32
  }
  func.func @transform_5(%arg0: i32, %arg1: i32) -> (i32, i32) {
    %c0_i32 = arith.constant 0 : i32
    %c0_i32_0 = arith.constant 0 : i32
    return %c0_i32, %arg0 : i32, i32
  }
  func.func @transform_6(%arg0: i32, %arg1: i32) -> (i32, i32) {
    %c0_i32 = arith.constant 0 : i32
    %c0_i32_0 = arith.constant 0 : i32
    return %c0_i32, %arg0 : i32, i32
  }
  func.func @transform_7(%arg0: i32, %arg1: i32) -> (i32, i32) {
    %c0_i32 = arith.constant 0 : i32
    %c0_i32_0 = arith.constant 0 : i32
    return %c0_i32, %arg0 : i32, i32
  }
  func.func @transform_8(%arg0: i32, %arg1: i32) -> (i32, i32) {
    %c0_i32 = arith.constant 0 : i32
    %c0_i32_0 = arith.constant 0 : i32
    return %c0_i32, %arg0 : i32, i32
  }
}

</mosaic_0001>

<llo_original>
// kernel: _noisy_linear_padded.1
$region0: #{_noisy_linear_padded.1}
  #allocation0 [shape = 'u32[]', space=smem, size = 0x4, offset = 0x4, fixed_abs, tag = 'smem constant byte address 0x4 - core index']
  #allocation1 [shape = 'u32[144,128]{1,0:T(1,128)}', space=vmem, size = 0x12000, scoped, tag = 'internal scratch']
  #allocation2 [shape = 'f32[8,128]{1,0:T(8,128)}', space=vmem, size = 0x1000, scoped, tag = 'scratch operand']
  #allocation3 [shape = 'f32[8,128]{1,0:T(8,128)}', space=vmem, size = 0x1000, scoped, tag = 'scratch operand']
  %s0 = inlined_call_operand.vmem [shape: f32[8,128], index: 0, kind: input, shape index: {}]
  %s1 = inlined_call_operand.hbm [shape: f32[128,128], index: 1, kind: input, shape index: {}]
  %s2 = inlined_call_operand.hbm [shape: f32[128,128], index: 2, kind: input, shape index: {}]
  %s3 = inlined_call_operand.vmem [shape: f32[1,128], index: 3, kind: input, shape index: {}]
  %s4 = inlined_call_operand.vmem [shape: f32[1,128], index: 4, kind: input, shape index: {}]
  %s5 = inlined_call_operand.vmem [shape: f32[1,128], index: 5, kind: input, shape index: {}]
  %s6 = inlined_call_operand.vmem [shape: f32[1,128], index: 6, kind: input, shape index: {}]
  %s7 = inlined_call_operand.vmem [shape: f32[1,128], index: 7, kind: input, shape index: {}]
  %s8 = inlined_call_operand.hbm [shape: f32[8,128], index: 8, kind: output, shape index: {}]
  %s9 = sld [smem:[#allocation0]]
  $region58: #{_noisy_linear_padded.1} parent=0
    _
  %s11 = ssub.s32 1, %s9
  %s12 = scalar_select 0, %s11, %s9
  $region1: #{_noisy_linear_padded.1} parent=0
    #allocation4 [shape = 'u8[65536]{0}', space=vmem, size = 0x10000, scoped, tag = 'input window, operand 1, single buffered']
    #allocation5 [shape = 's32[1]{0}', space=sflag, size = 0x4, scoped, tag = 'scoped memory for _noisy_linear_padded.1']
    #allocation6 [shape = 's32[1]{0}', space=sflag, size = 0x4, scoped, tag = 'scoped memory for _noisy_linear_padded.1']
    #allocation7 [shape = 'u8[65536]{0}', space=vmem, size = 0x10000, scoped, tag = 'input window, operand 2, single buffered']
    #allocation8 [shape = 's32[1]{0}', space=sflag, size = 0x4, scoped, tag = 'scoped memory for _noisy_linear_padded.1']
    #allocation9 [shape = 'u8[4096]{0}', space=vmem, size = 0x1000, scoped, tag = 'output window, operand 0, single buffered']
    %13 = vsyncpa [#allocation5], 0
    %14 = vsyncpa [#allocation8], 0
    %15 = vsyncpa [#allocation6], 0
    // Predicated region
    $region2: #{_noisy_linear_padded.1} parent=1 // pred_check
      _
    $region3: #{_noisy_linear_padded.1} parent=1 // pred_check_branch
      %17 = sbr.rel (0) target = $region5
    $region4: #{_noisy_linear_padded.1} parent=1 // pred_region
      _
    $region5: #{_noisy_linear_padded.1} parent=1 // pred_fallthru
      _
    // Predicated region
    $region6: #{_noisy_linear_padded.1} parent=1 // pred_check
      _
    $region7: #{_noisy_linear_padded.1} parent=1 // pred_check_branch
      %19 = sbr.rel (0) target = $region9
    $region8: #{_noisy_linear_padded.1} parent=1 // pred_region
      %s21 = ssub.s32 2048, 2048
      %22 = vsyncadd [#allocation5], %s21
      %s23 = sshll.u32 [#allocation4], 4
      %s24 = int_to_ptr.vmem [resolvable:$true] %s23
      %29 = dma.hbm_to_vmem [thread:$0]  %s1, 2048, %s24, [#allocation5], 128, 128, 8
    $region9: #{_noisy_linear_padded.1} parent=1 // pred_fallthru
      _
    // Predicated region
    $region10: #{_noisy_linear_padded.1} parent=1 // pred_check
      _
    $region11: #{_noisy_linear_padded.1} parent=1 // pred_check_branch
      %31 = sbr.rel (0) target = $region13
    $region12: #{_noisy_linear_padded.1} parent=1 // pred_region
      %s33 = ssub.s32 2048, 2048
      %34 = vsyncadd [#allocation8], %s33
      %s35 = sshll.u32 [#allocation7], 4
      %s36 = int_to_ptr.vmem [resolvable:$true] %s35
      %41 = dma.hbm_to_vmem [thread:$0]  %s2, 2048, %s36, [#allocation8], 128, 128, 8
    $region13: #{_noisy_linear_padded.1} parent=1 // pred_fallthru
      _
    // Predicated region
    $region14: #{_noisy_linear_padded.1} parent=1 // pred_check
      _
    $region15: #{_noisy_linear_padded.1} parent=1 // pred_check_branch
      %43 = sbr.rel (0) target = $region17
    $region16: #{_noisy_linear_padded.1} parent=1 // pred_region
      _
    $region17: #{_noisy_linear_padded.1} parent=1 // pred_fallthru
      _
    // Predicated region
    $region18: #{_noisy_linear_padded.1} parent=1 // pred_check
      _
    $region19: #{_noisy_linear_padded.1} parent=1 // pred_check_branch
      %45 = sbr.rel (0) target = $region21
    $region20: #{_noisy_linear_padded.1} parent=1 // pred_region
      _
    $region21: #{_noisy_linear_padded.1} parent=1 // pred_fallthru
      _
    // Predicated region
    $region22: #{_noisy_linear_padded.1} parent=1 // pred_check
      _
    $region23: #{_noisy_linear_padded.1} parent=1 // pred_check_branch
      %47 = sbr.rel (0) target = $region25
    $region24: #{_noisy_linear_padded.1} parent=1 // pred_region
      _
    $region25: #{_noisy_linear_padded.1} parent=1 // pred_fallthru
      _
    // Predicated region
    $region26: #{_noisy_linear_padded.1} parent=1 // pred_check
      _
    $region27: #{_noisy_linear_padded.1} parent=1 // pred_check_branch
      %49 = sbr.rel (0) target = $region29
    $region28: #{_noisy_linear_padded.1} parent=1 // pred_region
      _
    $region29: #{_noisy_linear_padded.1} parent=1 // pred_fallthru
      _
    // Predicated region
    $region30: #{_noisy_linear_padded.1} parent=1 // pred_check
      _
    $region31: #{_noisy_linear_padded.1} parent=1 // pred_check_branch
      %51 = sbr.rel (0) target = $region33
    $region32: #{_noisy_linear_padded.1} parent=1 // pred_region
      _
    $region33: #{_noisy_linear_padded.1} parent=1 // pred_fallthru
      _
    // Predicated region
    $region34: #{_noisy_linear_padded.1} parent=1 // pred_check
      _
    $region35: #{_noisy_linear_padded.1} parent=1 // pred_check_branch
      %53 = sbr.rel (0) target = $region37
    $region36: #{_noisy_linear_padded.1} parent=1 // pred_region
      %54 = dma.done [#allocation5], 2048
    $region37: #{_noisy_linear_padded.1} parent=1 // pred_fallthru
      _
    // Predicated region
    $region38: #{_noisy_linear_padded.1} parent=1 // pred_check
      _
    $region39: #{_noisy_linear_padded.1} parent=1 // pred_check_branch
      %56 = sbr.rel (0) target = $region41
    $region40: #{_noisy_linear_padded.1} parent=1 // pred_region
      %57 = dma.done [#allocation8], 2048
    $region41: #{_noisy_linear_padded.1} parent=1 // pred_fallthru
      _
    %p58 = scmp.eq.s32.totalorder 0, 0
    // Predicated region
    $region42: #{_noisy_linear_padded.1} parent=1 // pred_check
      %p59 = pneg %p58
    $region43: #{_noisy_linear_padded.1} parent=1 // pred_check_branch
      %61 = sbr.rel (%p59) target = $region45
    $region44: #{_noisy_linear_padded.1} parent=1 // pred_region
      %62 = vst [vmem:[#allocation2] sm:$0xff] 0.0
      %63 = vst [vmem:[#allocation3] sm:$0xff] 0.0
    $region45: #{_noisy_linear_padded.1} parent=1 // pred_fallthru
      _
    %v64 = vld [vmem:[%s0] sm:$0xff]
    %v65 = vld [vmem:[%s3] sm:$0x1]
    %v67 = vlaneseq
    %v68 = vshrl.u32 %v67, 7
    %v69 = vsub.s32 0, %v68
    %v70 = vrot.slane %v65, %v69
    %v72 = vmul.f32 %v64, %v70
    %v73 = vld [vmem:[#allocation2] sm:$0xff]
    %v74 = vld [vmem:[#allocation4] sm:$0xff]
    %v75 = vld [vmem:[#allocation4 + $0x8] sm:$0xff]
    %v76 = vld [vmem:[#allocation4 + $0x10] sm:$0xff]
    %v77 = vld [vmem:[#allocation4 + $0x18] sm:$0xff]
    %v78 = vld [vmem:[#allocation4 + $0x20] sm:$0xff]
    %v79 = vld [vmem:[#allocation4 + $0x28] sm:$0xff]
    %v80 = vld [vmem:[#allocation4 + $0x30] sm:$0xff]
    %v81 = vld [vmem:[#allocation4 + $0x38] sm:$0xff]
    %v82 = vld [vmem:[#allocation4 + $0x40] sm:$0xff]
    %v83 = vld [vmem:[#allocation4 + $0x48] sm:$0xff]
    %v84 = vld [vmem:[#allocation4 + $0x50] sm:$0xff]
    %v85 = vld [vmem:[#allocation4 + $0x58] sm:$0xff]
    %v86 = vld [vmem:[#allocation4 + $0x60] sm:$0xff]
    %v87 = vld [vmem:[#allocation4 + $0x68] sm:$0xff]
    %v88 = vld [vmem:[#allocation4 + $0x70] sm:$0xff]
    %v89 = vld [vmem:[#allocation4 + $0x78] sm:$0xff]
    %90 = vmatprep.subr.mxu0 0.0
    %91 = vmatpush1.msra.mxu0 %v74
    %92 = vmatprep.subr.mxu0 0.0
    %93 = vmatpush1.msra.mxu0 %v75
    %94 = vmatprep.subr.mxu0 0.0
    %95 = vmatpush1.msra.mxu0 %v76
    %96 = vmatprep.subr.mxu0 0.0
    %97 = vmatpush1.msra.mxu0 %v77
    %98 = vmatprep.subr.mxu0 0.0
    %99 = vmatpush1.msra.mxu0 %v78
    %100 = vmatprep.subr.mxu0 0.0
    %101 = vmatpush1.msra.mxu0 %v79
    %102 = vmatprep.subr.mxu0 0.0
    %103 = vmatpush1.msra.mxu0 %v80
    %104 = vmatprep.subr.mxu0 0.0
    %105 = vmatpush1.msra.mxu0 %v81
    %106 = vmatprep.subr.mxu0 0.0
    %107 = vmatpush1.msra.mxu0 %v82
    %108 = vmatprep.subr.mxu0 0.0
    %109 = vmatpush1.msra.mxu0 %v83
    %110 = vmatprep.subr.mxu0 0.0
    %111 = vmatpush1.msra.mxu0 %v84
    %112 = vmatprep.subr.mxu0 0.0
    %113 = vmatpush1.msra.mxu0 %v85
    %114 = vmatprep.subr.mxu0 0.0
    %115 = vmatpush1.msra.mxu0 %v86
    %116 = vmatprep.subr.mxu0 0.0
    %117 = vmatpush1.msra.mxu0 %v87
    %118 = vmatprep.subr.mxu0 0.0
    %119 = vmatpush1.msra.mxu0 %v88
    %120 = vmatprep.subr.mxu0 0.0
    %121 = vmatpush1.msra.mxu0 %v89
    %122 = vmatprep.subr.mxu0 0.0
    %123 = vmatpush1.msra.mxu0 0.0
    %124 = vmatprep.subr.mxu0 0.0
    %125 = vmatpush1.msra.mxu0 0.0
    %126 = vmatprep.subr.mxu0 0.0
    %127 = vmatpush1.msra.mxu0 0.0
    %128 = vmatprep.subr.mxu0 0.0
    %129 = vmatpush1.msra.mxu0 0.0
    %130 = vmatprep.subr.mxu0 0.0
    %131 = vmatpush1.msra.mxu0 0.0
    %132 = vmatprep.subr.mxu0 0.0
    %133 = vmatpush1.msra.mxu0 0.0
    %134 = vmatprep.subr.mxu0 0.0
    %135 = vmatpush1.msra.mxu0 0.0
    %136 = vmatprep.subr.mxu0 0.0
    %137 = vmatpush1.msra.mxu0 0.0
    %138 = vmatprep.subr.mxu0 0.0
    %139 = vmatpush1.msra.mxu0 0.0
    %140 = vmatprep.subr.mxu0 0.0
    %141 = vmatpush1.msra.mxu0 0.0
    %142 = vmatprep.subr.mxu0 0.0
    %143 = vmatpush1.msra.mxu0 0.0
    %144 = vmatprep.subr.mxu0 0.0
    %145 = vmatpush1.msra.mxu0 0.0
    %146 = vmatprep.subr.mxu0 0.0
    %147 = vmatpush1.msra.mxu0 0.0
    %148 = vmatprep.subr.mxu0 0.0
    %149 = vmatpush1.msra.mxu0 0.0
    %150 = vmatprep.subr.mxu0 0.0
    %151 = vmatpush1.msra.mxu0 0.0
    %152 = vmatprep.subr.mxu0 0.0
    %153 = vmatpush1.msra.mxu0 0.0
    %154 = vmatprep.mubr.f32.mxu0 0.0
    %155 = vmatmul.mubr.f32.gmra.mrb[0].mxu0 %v64
    %v156 = vpop.f32.mrb[0].mxu0
    %v157 = vadd.f32 0.0, %v156
    %v158 = vpop.f32.mrb[0].mxu0
    %159 = vdwg.mxu0
    %v160 = vadd.f32 %v73, %v157
    %161 = vst [vmem:[#allocation2] sm:$0xff] %v160
    %v162 = vld [vmem:[#allocation3] sm:$0xff]
    %v163 = vld [vmem:[#allocation7] sm:$0xff]
    %v164 = vld [vmem:[#allocation7 + $0x8] sm:$0xff]
    %v165 = vld [vmem:[#allocation7 + $0x10] sm:$0xff]
    %v166 = vld [vmem:[#allocation7 + $0x18] sm:$0xff]
    %v167 = vld [vmem:[#allocation7 + $0x20] sm:$0xff]
    %v168 = vld [vmem:[#allocation7 + $0x28] sm:$0xff]
    %v169 = vld [vmem:[#allocation7 + $0x30] sm:$0xff]
    %v170 = vld [vmem:[#allocation7 + $0x38] sm:$0xff]
    %v171 = vld [vmem:[#allocation7 + $0x40] sm:$0xff]
    %v172 = vld [vmem:[#allocation7 + $0x48] sm:$0xff]
    %v173 = vld [vmem:[#allocation7 + $0x50] sm:$0xff]
    %v174 = vld [vmem:[#allocation7 + $0x58] sm:$0xff]
    %v175 = vld [vmem:[#allocation7 + $0x60] sm:$0xff]
    %v176 = vld [vmem:[#allocation7 + $0x68] sm:$0xff]
    %v177 = vld [vmem:[#allocation7 + $0x70] sm:$0xff]
    %v178 = vld [vmem:[#allocation7 + $0x78] sm:$0xff]
    %179 = vmatprep.subr.mxu0 0.0
    %180 = vmatpush1.msra.mxu0 %v163
    %181 = vmatprep.subr.mxu0 0.0
    %182 = vmatpush1.msra.mxu0 %v164
    %183 = vmatprep.subr.mxu0 0.0
    %184 = vmatpush1.msra.mxu0 %v165
    %185 = vmatprep.subr.mxu0 0.0
    %186 = vmatpush1.msra.mxu0 %v166
    %187 = vmatprep.subr.mxu0 0.0
    %188 = vmatpush1.msra.mxu0 %v167
    %189 = vmatprep.subr.mxu0 0.0
    %190 = vmatpush1.msra.mxu0 %v168
    %191 = vmatprep.subr.mxu0 0.0
    %192 = vmatpush1.msra.mxu0 %v169
    %193 = vmatprep.subr.mxu0 0.0
    %194 = vmatpush1.msra.mxu0 %v170
    %195 = vmatprep.subr.mxu0 0.0
    %196 = vmatpush1.msra.mxu0 %v171
    %197 = vmatprep.subr.mxu0 0.0
    %198 = vmatpush1.msra.mxu0 %v172
    %199 = vmatprep.subr.mxu0 0.0
    %200 = vmatpush1.msra.mxu0 %v173
    %201 = vmatprep.subr.mxu0 0.0
    %202 = vmatpush1.msra.mxu0 %v174
    %203 = vmatprep.subr.mxu0 0.0
    %204 = vmatpush1.msra.mxu0 %v175
    %205 = vmatprep.subr.mxu0 0.0
    %206 = vmatpush1.msra.mxu0 %v176
    %207 = vmatprep.subr.mxu0 0.0
    %208 = vmatpush1.msra.mxu0 %v177
    %209 = vmatprep.subr.mxu0 0.0
    %210 = vmatpush1.msra.mxu0 %v178
    %211 = vmatprep.subr.mxu0 0.0
    %212 = vmatpush1.msra.mxu0 0.0
    %213 = vmatprep.subr.mxu0 0.0
    %214 = vmatpush1.msra.mxu0 0.0
    %215 = vmatprep.subr.mxu0 0.0
    %216 = vmatpush1.msra.mxu0 0.0
    %217 = vmatprep.subr.mxu0 0.0
    %218 = vmatpush1.msra.mxu0 0.0
    %219 = vmatprep.subr.mxu0 0.0
    %220 = vmatpush1.msra.mxu0 0.0
    %221 = vmatprep.subr.mxu0 0.0
    %222 = vmatpush1.msra.mxu0 0.0
    %223 = vmatprep.subr.mxu0 0.0
    %224 = vmatpush1.msra.mxu0 0.0
    %225 = vmatprep.subr.mxu0 0.0
    %226 = vmatpush1.msra.mxu0 0.0
    %227 = vmatprep.subr.mxu0 0.0
    %228 = vmatpush1.msra.mxu0 0.0
    %229 = vmatprep.subr.mxu0 0.0
    %230 = vmatpush1.msra.mxu0 0.0
    %231 = vmatprep.subr.mxu0 0.0
    %232 = vmatpush1.msra.mxu0 0.0
    %233 = vmatprep.subr.mxu0 0.0
    %234 = vmatpush1.msra.mxu0 0.0
    %235 = vmatprep.subr.mxu0 0.0
    %236 = vmatpush1.msra.mxu0 0.0
    %237 = vmatprep.subr.mxu0 0.0
    %238 = vmatpush1.msra.mxu0 0.0
    %239 = vmatprep.subr.mxu0 0.0
    %240 = vmatpush1.msra.mxu0 0.0
    %241 = vmatprep.subr.mxu0 0.0
    %242 = vmatpush1.msra.mxu0 0.0
    %243 = vmatprep.mubr.f32.mxu0 0.0
    %244 = vmatmul.mubr.f32.gmra.mrb[0].mxu0 %v72
    %v245 = vpop.f32.mrb[0].mxu0
    %v246 = vadd.f32 0.0, %v245
    %v247 = vpop.f32.mrb[0].mxu0
    %248 = vdwg.mxu0
    %v249 = vadd.f32 %v162, %v246
    %250 = vst [vmem:[#allocation3] sm:$0xff] %v249
    // Predicated region
    $region46: #{_noisy_linear_padded.1} parent=1 // pred_check
      %p251 = pneg %p58
    $region47: #{_noisy_linear_padded.1} parent=1 // pred_check_branch
      %253 = sbr.rel (%p251) target = $region49
    $region48: #{_noisy_linear_padded.1} parent=1 // pred_region
      %v254 = vld [vmem:[%s5] sm:$0x1]
      %v255 = vld [vmem:[%s6] sm:$0x1]
      %v256 = vld [vmem:[%s7] sm:$0x1]
      %v257 = vmul.f32 %v255, %v256
      %v258 = vadd.f32 %v254, %v257
      %v259 = vld [vmem:[#allocation2] sm:$0xff]
      %v260 = vld [vmem:[#allocation3] sm:$0xff]
      %v261 = vld [vmem:[%s4] sm:$0x1]
      %v263 = vlaneseq
      %v264 = vshrl.u32 %v263, 7
      %v265 = vsub.s32 0, %v264
      %v266 = vrot.slane %v261, %v265
      %v268 = vmul.f32 %v260, %v266
      %v269 = vadd.f32 %v259, %v268
      %v271 = vlaneseq
      %v272 = vshrl.u32 %v271, 7
      %v273 = vsub.s32 0, %v272
      %v274 = vrot.slane %v258, %v273
      %v276 = vadd.f32 %v269, %v274
      %277 = vst [vmem:[#allocation9] sm:$0xff] %v276
    $region49: #{_noisy_linear_padded.1} parent=1 // pred_fallthru
      _
    // Predicated region
    $region50: #{_noisy_linear_padded.1} parent=1 // pred_check
      _
    $region51: #{_noisy_linear_padded.1} parent=1 // pred_check_branch
      %279 = sbr.rel (0) target = $region53
    $region52: #{_noisy_linear_padded.1} parent=1 // pred_region
      %s281 = ssub.s32 128, 128
      %282 = vsyncadd [#allocation6], %s281
      %s284 = sshll.u32 [#allocation9], 4
      %s285 = int_to_ptr.vmem [resolvable:$true] %s284
      %287 = dma.vmem_to_hbm [thread:$0]  %s285, 128, %s8, [#allocation6]
    $region53: #{_noisy_linear_padded.1} parent=1 // pred_fallthru
      _
    // Predicated region
    $region54: #{_noisy_linear_padded.1} parent=1 // pred_check
      _
    $region55: #{_noisy_linear_padded.1} parent=1 // pred_check_branch
      %289 = sbr.rel (0) target = $region57
    $region56: #{_noisy_linear_padded.1} parent=1 // pred_region
      %290 = dma.done [#allocation6], 128
    $region57: #{_noisy_linear_padded.1} parent=1 // pred_fallthru
      _
    %291 = vsyncpa [#allocation5], 1
    %292 = vsyncpa [#allocation8], 1
    %293 = vsyncpa [#allocation6], 1

</llo_original>
